<compile_context>
chip_gen: v7x
topology: tpu7x:2x2x1
jax: 0.10.0
libtpu: 0.0.40
codegen_flags: <defaults>
</compile_context>

<pallas_src>
import random

import jax
import jax.numpy as jnp
from jax.experimental import pallas as pl
from jax.experimental.pallas import tpu as pltpu


# ----------------------------------------------------------------------------
# Kernel
# ----------------------------------------------------------------------------
def _make_kernel(*, nc, h, w, bc, hf, wf, ar, patch_size, steps_per_core,
                 need_s, need_mse_is, need_l1_is, need_tv):
    inv_nc = 1.0 / nc
    inv_elems = 1.0 / (nc * h * w)
    ps = int(patch_size)
    tv_scale = 0.003 / (max(ps * (ps - 1), 1) * nc)

    need_resid = need_mse_is or need_l1_is
    need_dz = need_resid or need_tv
    need_sp = need_s or need_resid

    def partial_rows(x3):
        # (bc, hf, wf) f32 -> (ar, wf): leading-axis sums are VALU-only adds;
        # the cross-sublane reduce is deferred to the finalize.
        if ar == hf:
            return jnp.sum(x3, axis=0)
        if ar == 1:
            return jnp.sum(jnp.sum(x3, axis=0), axis=0, keepdims=True)
        # hf % 8 == 0: tile-aligned regroup of sublanes, no data movement.
        return jnp.sum(x3.reshape(-1, ar, wf), axis=0)

    def kernel(noise_ref, denoise_ref, stripe_ref, weight_ref, losses_ref,
               acc_s_ref, acc_sq_ref, acc_abs_ref, acc_tv_ref):
        i = pl.program_id(1)

        @pl.when(i == 0)
        def _init():
            acc_s_ref[...] = jnp.zeros_like(acc_s_ref)
            acc_sq_ref[...] = jnp.zeros_like(acc_sq_ref)
            acc_abs_ref[...] = jnp.zeros_like(acc_abs_ref)
            acc_tv_ref[...] = jnp.zeros_like(acc_tv_ref)

        if need_sp:
            sp = stripe_ref[0].astype(jnp.float32)           # (bc, wf)
        if need_dz:
            dz = denoise_ref[...].astype(jnp.float32)        # (bc, hf, wf)

        # --- MSE_S partial: sum over channels of (mean_w stripe)^2 ----------
        if need_s:
            m = jnp.mean(sp, axis=1, keepdims=True)          # (bc, 1)
            acc_s_ref[...] += jnp.sum(m * m, axis=0, keepdims=True)

        # --- shared residual for MSE_I_S / L1_I_S ---------------------------
        if need_resid:
            # noise cast fused into the expression: no standalone f32 copy.
            resid = dz + sp[:, None, :] - noise_ref[...].astype(jnp.float32)
            if need_mse_is:
                acc_sq_ref[...] += partial_rows(resid * resid)
            if need_l1_is:
                acc_abs_ref[...] += partial_rows(jnp.abs(resid))

        # --- TVx_Ip on the resident denoise tile -----------------------------
        if need_tv:
            # Lane-dense horizontal diff via an XLU rotate (shift wf-1 == -1).
            # Wrap-around / fold-boundary columns have zero weight.
            shifted = pltpu.roll(dz, wf - 1, 2)              # dz[..., l+1]
            # Overlapping patches accumulate +1 per covering patch in `weight`
            # (matches the reference, which sums each patch's TV separately).
            acc_tv_ref[...] += partial_rows(
                jnp.abs(shifted - dz) * weight_ref[...])

        # --- epilogue: one cross-lane reduce + scale + packed output store ---
        @pl.when(i == steps_per_core - 1)
        def _finalize():
            def tot(acc):                                    # (ar, wf) -> (1, 1)
                return jnp.sum(jnp.sum(acc, axis=1, keepdims=True),
                               axis=0, keepdims=True)

            zero = jnp.zeros((1, 1), jnp.float32)
            mse_s = (acc_s_ref[...] * jnp.float32(0.01 * inv_nc)
                     if need_s else zero)
            mse_is = (tot(acc_sq_ref[...]) * jnp.float32(inv_elems)
                      if need_mse_is else zero)
            l1_is = (tot(acc_abs_ref[...]) * jnp.float32(inv_elems)
                     if need_l1_is else zero)
            tvx = (tot(acc_tv_ref[...]) * jnp.float32(tv_scale)
                   if need_tv else zero)
            losses_ref[0, :, 0:1] = mse_s
            losses_ref[0, :, 1:2] = mse_is
            losses_ref[0, :, 2:3] = l1_is
            losses_ref[0, :, 3:4] = tvx

    return kernel


# ----------------------------------------------------------------------------
# Wrapper-side helpers
# ----------------------------------------------------------------------------
def _tpu_tuning():
    """(n_tensorcores, per-input f32 block budget, vmem_limit_bytes)."""
    try:
        kind = jax.devices()[0].device_kind.lower()
    except Exception:
        kind = ""
    if "v7" in kind:                       # 2 TCs, 64 MiB physical VMEM
        return 2, 3 << 20, 48 << 20
    if "v6" in kind or "trillium" in kind:  # 1 TC, 128 MiB VMEM
        return 1, 6 << 20, 64 << 20
    if "v5p" in kind or "v4" in kind:       # megacore
        return 2, 4 << 20, 64 << 20
    return 1, 2 << 20, 48 << 20             # v5e / unknown: stay conservative


def _pick_fold(h, w):
    """Fold g image rows into the lane axis when W is narrow (< 128)."""
    if w >= 128:
        return 1
    best = 1
    for g in range(1, h + 1):
        if h % g:
            continue
        if g * w > 512:
            break
        if (g * w) % 128 == 0:
            return g                       # smallest g filling the lane axis
        if g * w <= 128:
            best = g
    return best
# TODO(synk): very narrow images still under-fill sublanes inside the rank-3
# block; full (rows x channels) sublane packing needs an in-kernel relayouting
# reshape (or an extra full-size stripe image) and was left out deliberately.


def _choose_blocking(nc, hf, wf, itemsize, budget, n_cores, block_nc):
    """Pick channels/block (divisor of nc) and per-core step count."""
    per_chan = hf * wf * max(int(itemsize), 4)   # f32 temporaries dominate
    if block_nc is None:
        want = max(1, min(nc, budget // max(per_chan, 1)))
    else:
        want = max(1, min(int(block_nc), nc))
    divs = [d for d in range(1, want + 1) if nc % d == 0]
    even = [d for d in divs if (nc // d) % n_cores == 0]
    if even:
        bc = max(even)
    else:                                   # cannot split evenly across cores
        bc = max(divs)
        n_cores = 1
    return bc, n_cores, (nc // bc) // n_cores


def _build_tv_weight(h, w, g, h_offsets, w_offsets, patch_size):
    """Per-pixel patch-coverage count for the horizontal diff, folded layout."""
    rows = jnp.arange(h, dtype=jnp.int32)[:, None]           # (H, 1)
    cols = jnp.arange(w, dtype=jnp.int32)[None, :]           # (1, W)
    ho = jnp.asarray(h_offsets, jnp.int32).reshape(-1, 1, 1)  # (P, 1, 1)
    wo = jnp.asarray(w_offsets, jnp.int32).reshape(-1, 1, 1)
    inside = ((rows[None] >= ho) & (rows[None] < ho + patch_size) &
              (cols[None] >= wo) & (cols[None] < wo + patch_size - 1))
    weight = jnp.sum(inside.astype(jnp.float32), axis=0)     # (H, W)
    # Kill the diff that would wrap across image rows / fold boundaries.
    weight = weight * (cols < (w - 1)).astype(jnp.float32)
    return weight.reshape(h // g, g * w)


# ----------------------------------------------------------------------------
# Public wrapper
# ----------------------------------------------------------------------------
def calculate_multi_loss_pallas(noise, denoise, stripe, stripe_,
                                h_offsets, w_offsets, patch_size, loss_type,
                                block_nc=None):
    """Pallas port of calculate_multi_loss.forward (see header notes)."""
    del stripe  # unused by the reference forward as well
    n, c, h, w = denoise.shape
    nc = n * c

    need_s = "MSE_S" in loss_type
    need_mse_is = "MSE_I_S" in loss_type
    need_l1_is = "L1_I_S" in loss_type
    need_tv = "TVx_Ip" in loss_type

    g = _pick_fold(h, w)
    hf, wf = h // g, g * w

    n_cores, budget, vmem_limit = _tpu_tuning()
    bc, n_cores, spc = _choose_blocking(nc, hf, wf, denoise.dtype.itemsize,
                                        budget, n_cores, block_nc)
    n_blocks = nc // bc

    # Accumulator row count: keep scratch bounded and reductions VALU-only.
    if hf % 8 == 0:
        ar = 8
    elif hf <= 64:
        ar = hf
    else:
        ar = 1

    noise3 = noise.reshape(nc, hf, wf)
    denoise3 = denoise.reshape(nc, hf, wf)
    stripe3 = jnp.tile(stripe_.reshape(nc, w), (1, g)).reshape(n_blocks, bc, wf)
    if need_tv:
        weight = _build_tv_weight(h, w, g, h_offsets, w_offsets, int(patch_size))
    else:
        weight = jnp.zeros((1, 1), jnp.float32)               # unused dummy

    kernel = _make_kernel(nc=nc, h=h, w=w, bc=bc, hf=hf, wf=wf, ar=ar,
                          patch_size=patch_size, steps_per_core=spc,
                          need_s=need_s, need_mse_is=need_mse_is,
                          need_l1_is=need_l1_is, need_tv=need_tv)

    img_map = lambda core, i: (core * spc + i, 0, 0)
    const_map = lambda core, i: (0, 0)

    grid_spec = pltpu.PrefetchScalarGridSpec(
        num_scalar_prefetch=0,
        grid=(n_cores, spc),
        in_specs=[
            pl.BlockSpec((bc, hf, wf), img_map),        # noise
            pl.BlockSpec((bc, hf, wf), img_map),        # denoise
            pl.BlockSpec((1, bc, wf), img_map),         # stripe_ (per-channel)
            pl.BlockSpec(weight.shape, const_map),      # TV weight (resident)
        ],
        out_specs=pl.BlockSpec((1, 1, 4), lambda core, i: (core, 0, 0)),
        scratch_shapes=[
            pltpu.VMEM((1, 1), jnp.float32),            # sum_c (mean_w stripe)^2
            pltpu.VMEM((ar, wf), jnp.float32),          # sum resid^2
            pltpu.VMEM((ar, wf), jnp.float32),          # sum |resid|
            pltpu.VMEM((ar, wf), jnp.float32),          # sum patch-weighted |dW|
        ],
    )

    in_bytes = (noise3.size * noise3.dtype.itemsize
                + denoise3.size * denoise3.dtype.itemsize
                + stripe3.size * stripe3.dtype.itemsize
                + weight.size * 4)
    flops = nc * h * w * ((6 if (need_mse_is or need_l1_is) else 1)
                          + (3 if need_tv else 0))
    cost = pl.CostEstimate(flops=max(int(flops), 1), transcendentals=0,
                           bytes_accessed=in_bytes + 16 * n_cores)

    outs = pl.pallas_call(
        kernel,
        out_shape=jax.ShapeDtypeStruct((n_cores, 1, 4), jnp.float32),
        grid_spec=grid_spec,
        compiler_params=pltpu.CompilerParams(
            dimension_semantics=("parallel", "arbitrary"),
            vmem_limit_bytes=vmem_limit),
        cost_estimate=cost,
    )(noise3, denoise3, stripe3, weight)

    # Per-core partial losses are already scaled; summing them is exact.
    per = jnp.sum(outs, axis=(0, 1))                    # (4,)
    mse_s, mse_i_s, l1_i_s, tvx = per[0], per[1], per[2], per[3]

    loss_dict = {}
    total = jnp.float32(0.0)
    if need_s:
        loss_dict["MSE_S"] = mse_s
        total = total + mse_s
    if need_mse_is:
        loss_dict["MSE_I_S"] = mse_i_s
        total = total + mse_i_s
    if need_l1_is:
        loss_dict["L1_I_S"] = l1_i_s
        total = total + l1_i_s
    if need_tv:
        loss_dict["TVx_Ip"] = tvx
        total = total + tvx
    loss_dict["total"] = total
    return loss_dict


# ----------------------------------------------------------------------------
# Pure-jnp reference (transliteration of the PyTorch forward) + self-test
# ----------------------------------------------------------------------------
def reference_losses(noise, denoise, stripe_, patch_offsets, patch_size, loss_type):
    d = {}
    total = jnp.float32(0.0)
    if "MSE_S" in loss_type:
        sm = jnp.mean(stripe_, axis=(-2, -1), keepdims=True)
        l = jnp.mean(sm ** 2) * 0.01
        d["MSE_S"] = l
        total = total + l
    if "MSE_I_S" in loss_type:
        rep = jnp.tile(stripe_, (1, 1, denoise.shape[2], 1))
        l = jnp.mean((denoise + rep - noise) ** 2)
        d["MSE_I_S"] = l
        total = total + l
    if "L1_I_S" in loss_type:
        rep = jnp.tile(stripe_, (1, 1, denoise.shape[2], 1))
        l = jnp.mean(jnp.abs(denoise + rep - noise))
        d["L1_I_S"] = l
        total = total + l
    if "TVx_Ip" in loss_type:
        l = jnp.float32(0.0)
        for (ho, wo) in patch_offsets:
            A = denoise[:, :, ho:ho + patch_size, wo:wo + patch_size]
            dw = A[:, :, :, 1:] - A[:, :, :, :-1]
            tv = jnp.mean(jnp.abs(dw), axis=(2, 3))
            l = l + jnp.mean(jnp.sum(tv, axis=1) / A.shape[1])
        l = l * 0.003
        d["TVx_Ip"] = l
        total = total + l
    d["total"] = total
    return d


def _run_and_check(noise, denoise, stripe_, h_off, w_off, ps, loss_type, blk):
    out = calculate_multi_loss_pallas(noise, denoise, stripe_, stripe_,
                                      h_off, w_off, ps, loss_type,
                                      block_nc=blk)
    jax.block_until_ready(out["total"])
    ref = reference_losses(noise, denoise, stripe_,
                           list(zip(h_off, w_off)), ps, loss_type)
    for k in ref:
        a, b = float(out[k]), float(ref[k])
        assert abs(a - b) <= 1e-4 + 1e-4 * abs(b), (loss_type, k, a, b)


if __name__ == "__main__":
    random.seed(0)
    key = jax.random.PRNGKey(0)
    PN, PS = 2, 8

    # Case 1: narrow image (W=16) -> lane-fold path (g=8, Wf=128); multi-step
    # accumulation with an explicit small block, then the auto-picked block.
    N, C, H, W = 2, 4, 16, 16
    k1, k2, k3, key = jax.random.split(key, 4)
    noise = jax.random.normal(k1, (N, C, H, W), jnp.float32)
    denoise = jax.random.normal(k2, (N, C, H, W), jnp.float32)
    stripe_ = jax.random.normal(k3, (N, C, 1, W), jnp.float32) * 0.1
    h_off, w_off = [], []
    for _ in range(PN):
        w_off.append(random.randint(0, max(0, W - PS - 1)))
        h_off.append(random.randint(0, max(0, H - PS - 1)))
    _run_and_check(noise, denoise, stripe_, h_off, w_off, PS,
                   ("MSE_S", "MSE_I_S", "TVx_Ip"), 2)
    _run_and_check(noise, denoise, stripe_, h_off, w_off, PS,
                   ("MSE_S", "MSE_I_S", "L1_I_S", "TVx_Ip"), None)

    # Case 2: lane-dense image (W=128), no fold, (8, W) accumulator path,
    # odd step count (exercises the single-core fallback), all four losses.
    N2, C2, H2, W2 = 1, 3, 16, 128
    k1, k2, k3, key = jax.random.split(key, 4)
    noise2 = jax.random.normal(k1, (N2, C2, H2, W2), jnp.float32)
    denoise2 = jax.random.normal(k2, (N2, C2, H2, W2), jnp.float32)
    stripe2_ = jax.random.normal(k3, (N2, C2, 1, W2), jnp.float32) * 0.1
    h_off2, w_off2 = [], []
    for _ in range(PN):
        w_off2.append(random.randint(0, max(0, W2 - PS - 1)))
        h_off2.append(random.randint(0, max(0, H2 - PS - 1)))
    _run_and_check(noise2, denoise2, stripe2_, h_off2, w_off2, PS,
                   ("MSE_S", "MSE_I_S", "L1_I_S", "TVx_Ip"), 1)

    print("KERNEL_OK")
</pallas_src>

<mosaic_0001>
module attributes {stable_mosaic.version = 11 : i64} {
  func.func @kernel(%arg0: i32, %arg1: i32, %arg2: memref<2x2x128xf32, #tpu.memory_space<vmem>>, %arg3: memref<2x2x128xf32, #tpu.memory_space<vmem>>, %arg4: memref<1x2x128xf32, #tpu.memory_space<vmem>>, %arg5: memref<2x128xf32, #tpu.memory_space<vmem>>, %arg6: memref<1x1x4xf32, #tpu.memory_space<vmem>>, %arg7: memref<1x1xf32, #tpu.memory_space<vmem>>, %arg8: memref<2x128xf32, #tpu.memory_space<vmem>>, %arg9: memref<2x128xf32, #tpu.memory_space<vmem>>, %arg10: memref<2x128xf32, #tpu.memory_space<vmem>>) attributes {dimension_semantics = [#tpu.dimension_semantics<parallel>, #tpu.dimension_semantics<arbitrary>], iteration_bounds = array<i64: 1, 4>, scalar_prefetch = 0 : i64, scratch_operands = 4 : i64, tpu.core_type = #tpu.core_type<tc>, window_params = [{transform_indices = @transform_0, window_bounds = array<i64: 2, 2, 128>}, {transform_indices = @transform_1, window_bounds = array<i64: 2, 2, 128>}, {transform_indices = @transform_2, window_bounds = array<i64: 1, 2, 128>}, {pipeline_mode = #tpu.pipeline_mode<synchronous>, transform_indices = @transform_3, window_bounds = array<i64: 2, 128>}, {transform_indices = @transform_4, window_bounds = array<i64: 1, 1, 4>}]} {
    %c0_i32 = arith.constant 0 : i32
    %0 = arith.cmpi eq, %arg1, %c0_i32 : i32
    %1 = arith.extui %0 : i1 to i32
    %c0_i32_0 = arith.constant 0 : i32
    %2 = arith.cmpi ne, %1, %c0_i32_0 : i32
    scf.if %2 {
      %cst_28 = arith.constant 0.000000e+00 : f32
      %40 = vector.broadcast %cst_28 : f32 to vector<1x1xf32>
      %c0_29 = arith.constant 0 : index
      %c0_30 = arith.constant 0 : index
      %41 = vector.load %arg7[%c0_29, %c0_30] : memref<1x1xf32, #tpu.memory_space<vmem>>, vector<1x1xf32>
      tpu.vector_store %arg7[%c0_29, %c0_30], %40 {strides = array<i32>} : memref<1x1xf32, #tpu.memory_space<vmem>>, vector<1x1xf32>,
      %cst_31 = arith.constant 0.000000e+00 : f32
      %42 = vector.broadcast %cst_31 : f32 to vector<2x128xf32>
      %c0_32 = arith.constant 0 : index
      %c0_33 = arith.constant 0 : index
      %43 = vector.load %arg8[%c0_32, %c0_33] : memref<2x128xf32, #tpu.memory_space<vmem>>, vector<2x128xf32>
      tpu.vector_store %arg8[%c0_32, %c0_33], %42 {strides = array<i32>} : memref<2x128xf32, #tpu.memory_space<vmem>>, vector<2x128xf32>,
      %cst_34 = arith.constant 0.000000e+00 : f32
      %44 = vector.broadcast %cst_34 : f32 to vector<2x128xf32>
      %c0_35 = arith.constant 0 : index
      %c0_36 = arith.constant 0 : index
      %45 = vector.load %arg9[%c0_35, %c0_36] : memref<2x128xf32, #tpu.memory_space<vmem>>, vector<2x128xf32>
      tpu.vector_store %arg9[%c0_35, %c0_36], %44 {strides = array<i32>} : memref<2x128xf32, #tpu.memory_space<vmem>>, vector<2x128xf32>,
      %cst_37 = arith.constant 0.000000e+00 : f32
      %46 = vector.broadcast %cst_37 : f32 to vector<2x128xf32>
      %c0_38 = arith.constant 0 : index
      %c0_39 = arith.constant 0 : index
      %47 = vector.load %arg10[%c0_38, %c0_39] : memref<2x128xf32, #tpu.memory_space<vmem>>, vector<2x128xf32>
      tpu.vector_store %arg10[%c0_38, %c0_39], %46 {strides = array<i32>} : memref<2x128xf32, #tpu.memory_space<vmem>>, vector<2x128xf32>,
    } else {
    }
    %c0 = arith.constant 0 : index
    %c0_1 = arith.constant 0 : index
    %c0_2 = arith.constant 0 : index
    %3 = vector.load %arg4[%c0, %c0_1, %c0_2] : memref<1x2x128xf32, #tpu.memory_space<vmem>>, vector<1x2x128xf32>
    %4 = vector.shape_cast %3 : vector<1x2x128xf32> to vector<2x128xf32>
    %c0_3 = arith.constant 0 : index
    %c0_4 = arith.constant 0 : index
    %c0_5 = arith.constant 0 : index
    %5 = vector.load %arg3[%c0_3, %c0_4, %c0_5] : memref<2x2x128xf32, #tpu.memory_space<vmem>>, vector<2x2x128xf32>
    %cst = arith.constant dense<0.000000e+00> : vector<2xf32>
    %6 = vector.multi_reduction <add>, %4, %cst [1] : vector<2x128xf32> to vector<2xf32>
    %7 = vector.shape_cast %6 : vector<2xf32> to vector<2x1xf32>
    %cst_6 = arith.constant 1.280000e+02 : f32
    %8 = vector.broadcast %cst_6 : f32 to vector<2x1xf32>
    %9 = arith.divf %7, %8 : vector<2x1xf32>
    %c0_7 = arith.constant 0 : index
    %c0_8 = arith.constant 0 : index
    %10 = vector.load %arg7[%c0_7, %c0_8] : memref<1x1xf32, #tpu.memory_space<vmem>>, vector<1x1xf32>
    %11 = arith.mulf %9, %9 : vector<2x1xf32>
    %cst_9 = arith.constant dense<0.000000e+00> : vector<1xf32>
    %12 = vector.multi_reduction <add>, %11, %cst_9 [0] : vector<2x1xf32> to vector<1xf32>
    %13 = vector.shape_cast %12 : vector<1xf32> to vector<1x1xf32>
    %14 = arith.addf %10, %13 : vector<1x1xf32>
    %c0_10 = arith.constant 0 : index
    %c0_11 = arith.constant 0 : index
    %15 = vector.load %arg7[%c0_10, %c0_11] : memref<1x1xf32, #tpu.memory_space<vmem>>, vector<1x1xf32>
    tpu.vector_store %arg7[%c0_10, %c0_11], %14 {strides = array<i32>} : memref<1x1xf32, #tpu.memory_space<vmem>>, vector<1x1xf32>,
    %16 = vector.shape_cast %4 : vector<2x128xf32> to vector<2x1x128xf32>
    %17 = vector.broadcast %16 : vector<2x1x128xf32> to vector<2x2x128xf32>
    %18 = arith.addf %5, %17 : vector<2x2x128xf32>
    %c0_12 = arith.constant 0 : index
    %c0_13 = arith.constant 0 : index
    %c0_14 = arith.constant 0 : index
    %19 = vector.load %arg2[%c0_12, %c0_13, %c0_14] : memref<2x2x128xf32, #tpu.memory_space<vmem>>, vector<2x2x128xf32>
    %20 = arith.subf %18, %19 : vector<2x2x128xf32>
    %c0_15 = arith.constant 0 : index
    %c0_16 = arith.constant 0 : index
    %21 = vector.load %arg8[%c0_15, %c0_16] : memref<2x128xf32, #tpu.memory_space<vmem>>, vector<2x128xf32>
    %22 = arith.mulf %20, %20 : vector<2x2x128xf32>
    %cst_17 = arith.constant dense<0.000000e+00> : vector<2x128xf32>
    %23 = vector.multi_reduction <add>, %22, %cst_17 [0] : vector<2x2x128xf32> to vector<2x128xf32>
    %24 = arith.addf %21, %23 : vector<2x128xf32>
    %c0_18 = arith.constant 0 : index
    %c0_19 = arith.constant 0 : index
    %25 = vector.load %arg8[%c0_18, %c0_19] : memref<2x128xf32, #tpu.memory_space<vmem>>, vector<2x128xf32>
    tpu.vector_store %arg8[%c0_18, %c0_19], %24 {strides = array<i32>} : memref<2x128xf32, #tpu.memory_space<vmem>>, vector<2x128xf32>,
    %c127_i32 = arith.constant 127 : i32
    %26 = tpu.dynamic_rotate %5 by %c127_i32 dim 2 : vector<2x2x128xf32>, i32 -> vector<2x2x128xf32>
    %c0_20 = arith.constant 0 : index
    %c0_21 = arith.constant 0 : index
    %27 = vector.load %arg10[%c0_20, %c0_21] : memref<2x128xf32, #tpu.memory_space<vmem>>, vector<2x128xf32>
    %28 = arith.subf %26, %5 : vector<2x2x128xf32>
    %29 = math.absf %28 : vector<2x2x128xf32>
    %c0_22 = arith.constant 0 : index
    %c0_23 = arith.constant 0 : index
    %30 = vector.load %arg5[%c0_22, %c0_23] : memref<2x128xf32, #tpu.memory_space<vmem>>, vector<2x128xf32>
    %31 = vector.shape_cast %30 : vector<2x128xf32> to vector<1x2x128xf32>
    %32 = vector.broadcast %31 : vector<1x2x128xf32> to vector<2x2x128xf32>
    %33 = arith.mulf %29, %32 : vector<2x2x128xf32>
    %cst_24 = arith.constant dense<0.000000e+00> : vector<2x128xf32>
    %34 = vector.multi_reduction <add>, %33, %cst_24 [0] : vector<2x2x128xf32> to vector<2x128xf32>
    %35 = arith.addf %27, %34 : vector<2x128xf32>
    %c0_25 = arith.constant 0 : index
    %c0_26 = arith.constant 0 : index
    %36 = vector.load %arg10[%c0_25, %c0_26] : memref<2x128xf32, #tpu.memory_space<vmem>>, vector<2x128xf32>
    tpu.vector_store %arg10[%c0_25, %c0_26], %35 {strides = array<i32>} : memref<2x128xf32, #tpu.memory_space<vmem>>, vector<2x128xf32>,
    %c3_i32 = arith.constant 3 : i32
    %37 = arith.cmpi eq, %arg1, %c3_i32 : i32
    %38 = arith.extui %37 : i1 to i32
    %c0_i32_27 = arith.constant 0 : i32
    %39 = arith.cmpi ne, %38, %c0_i32_27 : i32
    scf.if %39 {
      %cst_28 = arith.constant 0.000000e+00 : f32
      %40 = vector.broadcast %cst_28 : f32 to vector<1x1xf32>
      %c0_29 = arith.constant 0 : index
      %c0_30 = arith.constant 0 : index
      %41 = vector.load %arg7[%c0_29, %c0_30] : memref<1x1xf32, #tpu.memory_space<vmem>>, vector<1x1xf32>
      %cst_31 = arith.constant 1.250000e-03 : f32
      %42 = vector.broadcast %cst_31 : f32 to vector<1x1xf32>
      %43 = arith.mulf %41, %42 : vector<1x1xf32>
      %c0_32 = arith.constant 0 : index
      %c0_33 = arith.constant 0 : index
      %44 = vector.load %arg8[%c0_32, %c0_33] : memref<2x128xf32, #tpu.memory_space<vmem>>, vector<2x128xf32>
      %cst_34 = arith.constant dense<0.000000e+00> : vector<2xf32>
      %45 = vector.multi_reduction <add>, %44, %cst_34 [1] : vector<2x128xf32> to vector<2xf32>
      %46 = vector.shape_cast %45 : vector<2xf32> to vector<2x1xf32>
      %cst_35 = arith.constant dense<0.000000e+00> : vector<1xf32>
      %47 = vector.multi_reduction <add>, %46, %cst_35 [0] : vector<2x1xf32> to vector<1xf32>
      %48 = vector.shape_cast %47 : vector<1xf32> to vector<1x1xf32>
      %cst_36 = arith.constant 4.8828125E-4 : f32
      %49 = vector.broadcast %cst_36 : f32 to vector<1x1xf32>
      %50 = arith.mulf %48, %49 : vector<1x1xf32>
      %c0_37 = arith.constant 0 : index
      %c0_38 = arith.constant 0 : index
      %51 = vector.load %arg10[%c0_37, %c0_38] : memref<2x128xf32, #tpu.memory_space<vmem>>, vector<2x128xf32>
      %cst_39 = arith.constant dense<0.000000e+00> : vector<2xf32>
      %52 = vector.multi_reduction <add>, %51, %cst_39 [1] : vector<2x128xf32> to vector<2xf32>
      %53 = vector.shape_cast %52 : vector<2xf32> to vector<2x1xf32>
      %cst_40 = arith.constant dense<0.000000e+00> : vector<1xf32>
      %54 = vector.multi_reduction <add>, %53, %cst_40 [0] : vector<2x1xf32> to vector<1xf32>
      %55 = vector.shape_cast %54 : vector<1xf32> to vector<1x1xf32>
      %cst_41 = arith.constant 6.6964285E-6 : f32
      %56 = vector.broadcast %cst_41 : f32 to vector<1x1xf32>
      %57 = arith.mulf %55, %56 : vector<1x1xf32>
      %c0_42 = arith.constant 0 : index
      %c0_43 = arith.constant 0 : index
      %c0_44 = arith.constant 0 : index
      %58 = vector.load %arg6[%c0_42, %c0_43, %c0_44] : memref<1x1x4xf32, #tpu.memory_space<vmem>>, vector<1x1x1xf32>
      %59 = vector.shape_cast %58 : vector<1x1x1xf32> to vector<1x1xf32>
      %60 = vector.shape_cast %43 : vector<1x1xf32> to vector<1x1x1xf32>
      tpu.vector_store %arg6[%c0_42, %c0_43, %c0_44], %60 {strides = array<i32>} : memref<1x1x4xf32, #tpu.memory_space<vmem>>, vector<1x1x1xf32>,
      %c0_45 = arith.constant 0 : index
      %c0_46 = arith.constant 0 : index
      %c1 = arith.constant 1 : index
      %61 = vector.load %arg6[%c0_45, %c0_46, %c1] : memref<1x1x4xf32, #tpu.memory_space<vmem>>, vector<1x1x1xf32>
      %62 = vector.shape_cast %61 : vector<1x1x1xf32> to vector<1x1xf32>
      %63 = vector.shape_cast %50 : vector<1x1xf32> to vector<1x1x1xf32>
      tpu.vector_store %arg6[%c0_45, %c0_46, %c1], %63 {strides = array<i32>} : memref<1x1x4xf32, #tpu.memory_space<vmem>>, vector<1x1x1xf32>,
      %c0_47 = arith.constant 0 : index
      %c0_48 = arith.constant 0 : index
      %c2 = arith.constant 2 : index
      %64 = vector.load %arg6[%c0_47, %c0_48, %c2] : memref<1x1x4xf32, #tpu.memory_space<vmem>>, vector<1x1x1xf32>
      %65 = vector.shape_cast %64 : vector<1x1x1xf32> to vector<1x1xf32>
      %66 = vector.shape_cast %40 : vector<1x1xf32> to vector<1x1x1xf32>
      tpu.vector_store %arg6[%c0_47, %c0_48, %c2], %66 {strides = array<i32>} : memref<1x1x4xf32, #tpu.memory_space<vmem>>, vector<1x1x1xf32>,
      %c0_49 = arith.constant 0 : index
      %c0_50 = arith.constant 0 : index
      %c3 = arith.constant 3 : index
      %67 = vector.load %arg6[%c0_49, %c0_50, %c3] : memref<1x1x4xf32, #tpu.memory_space<vmem>>, vector<1x1x1xf32>
      %68 = vector.shape_cast %67 : vector<1x1x1xf32> to vector<1x1xf32>
      %69 = vector.shape_cast %57 : vector<1x1xf32> to vector<1x1x1xf32>
      tpu.vector_store %arg6[%c0_49, %c0_50, %c3], %69 {strides = array<i32>} : memref<1x1x4xf32, #tpu.memory_space<vmem>>, vector<1x1x1xf32>,
    } else {
    }
    return
  }
  func.func @transform_0(%arg0: i32, %arg1: i32) -> (i32, i32, i32) {
    %c4_i32 = arith.constant 4 : i32
    %0 = arith.muli %arg0, %c4_i32 : i32
    %1 = arith.addi %0, %arg1 : i32
    %c0_i32 = arith.constant 0 : i32
    %c0_i32_0 = arith.constant 0 : i32
    %c0_i32_1 = arith.constant 0 : i32
    return %1, %c0_i32, %c0_i32_0 : i32, i32, i32
  }
  func.func @transform_1(%arg0: i32, %arg1: i32) -> (i32, i32, i32) {
    %c4_i32 = arith.constant 4 : i32
    %0 = arith.muli %arg0, %c4_i32 : i32
    %1 = arith.addi %0, %arg1 : i32
    %c0_i32 = arith.constant 0 : i32
    %c0_i32_0 = arith.constant 0 : i32
    %c0_i32_1 = arith.constant 0 : i32
    return %1, %c0_i32, %c0_i32_0 : i32, i32, i32
  }
  func.func @transform_2(%arg0: i32, %arg1: i32) -> (i32, i32, i32) {
    %c4_i32 = arith.constant 4 : i32
    %0 = arith.muli %arg0, %c4_i32 : i32
    %1 = arith.addi %0, %arg1 : i32
    %c0_i32 = arith.constant 0 : i32
    %c0_i32_0 = arith.constant 0 : i32
    %c0_i32_1 = arith.constant 0 : i32
    return %1, %c0_i32, %c0_i32_0 : i32, i32, i32
  }
  func.func @transform_3(%arg0: i32, %arg1: i32) -> (i32, i32) {
    %c0_i32 = arith.constant 0 : i32
    %c0_i32_0 = arith.constant 0 : i32
    %c0_i32_1 = arith.constant 0 : i32
    return %c0_i32, %c0_i32_0 : i32, i32
  }
  func.func @transform_4(%arg0: i32, %arg1: i32) -> (i32, i32, i32) {
    %c0_i32 = arith.constant 0 : i32
    %c0_i32_0 = arith.constant 0 : i32
    %c0_i32_1 = arith.constant 0 : i32
    return %arg0, %c0_i32, %c0_i32_0 : i32, i32, i32
  }
}

</mosaic_0001>

<llo_original>
// kernel: tpu_custom_call.1
$region0: #{tpu_custom_call.1}
  #allocation0 [shape = 'u32[]', space=smem, size = 0x4, offset = 0x4, fixed_abs, tag = 'smem constant byte address 0x4 - core index']
  #allocation1 [shape = 'u32[144,128]{1,0:T(1,128)}', space=vmem, size = 0x12000, scoped, tag = 'internal scratch']
  #allocation2 [shape = 'f32[1,1]{1,0:T(1,128)}', space=vmem, size = 0x200, scoped, tag = 'scratch operand']
  #allocation3 [shape = 'f32[2,128]{1,0:T(2,128)}', space=vmem, size = 0x400, scoped, tag = 'scratch operand']
  #allocation4 [shape = 'f32[2,128]{1,0:T(2,128)}', space=vmem, size = 0x400, scoped, tag = 'scratch operand']
  #allocation5 [shape = 'f32[2,128]{1,0:T(2,128)}', space=vmem, size = 0x400, scoped, tag = 'scratch operand']
  %s0 = inlined_call_operand.hbm [shape: f32[8,2,128], index: 0, kind: input, shape index: {}]
  %s1 = inlined_call_operand.hbm [shape: f32[8,2,128], index: 1, kind: input, shape index: {}]
  %s2 = inlined_call_operand.hbm [shape: f32[4,2,128], index: 2, kind: input, shape index: {}]
  %s3 = inlined_call_operand.vmem [shape: f32[2,128], index: 3, kind: input, shape index: {}]
  %s4 = inlined_call_operand.hbm [shape: f32[1,1,4], index: 4, kind: output, shape index: {}]
  %s5 = sld [smem:[#allocation0]]
  $region69: #{tpu_custom_call.1} parent=0
    _
  %s7 = ssub.s32 1, %s5
  %s8 = scalar_select 0, %s7, %s5
  $region1: #{tpu_custom_call.1} parent=0
    #allocation6 [shape = 'u8[4096]{0}', space=vmem, size = 0x1000, scoped, tag = 'input window, operand 0']
    #allocation7 [shape = 's32[2]{0}', space=sflag, size = 0x8, scoped, tag = 'scoped memory for tpu_custom_call.1']
    #allocation8 [shape = 's32[2]{0}', space=sflag, size = 0x8, scoped, tag = 'scoped memory for tpu_custom_call.1']
    #allocation9 [shape = 'u8[4096]{0}', space=vmem, size = 0x1000, scoped, tag = 'input window, operand 1']
    #allocation10 [shape = 's32[2]{0}', space=sflag, size = 0x8, scoped, tag = 'scoped memory for tpu_custom_call.1']
    #allocation11 [shape = 'u8[2048]{0}', space=vmem, size = 0x800, scoped, tag = 'input window, operand 2']
    #allocation12 [shape = 'u8[512]{0}', space=vmem, size = 0x400, scoped, tag = 'output window, operand 0, single buffered']
    %9 = vsyncpa [#allocation7], 0
    %s10 = scalar_lea.sflag [#allocation7], 1
    %11 = vsyncpa %s10, 0
    %12 = vsyncpa [#allocation10], 0
    %s13 = scalar_lea.sflag [#allocation10], 1
    %14 = vsyncpa %s13, 0
    %15 = vsyncpa [#allocation8], 0
    loop: start=0, step=1, limit=6
    $region2: #{tpu_custom_call.1} parent=1 // loop_pre_header
      _
    $region3: #{tpu_custom_call.1} parent=1 // loop_header
      %s17 = sphi 0, %s21
      %p18 = scmp.ge.s32.totalorder %s17, 6
      %s24 = sphi 0, %s36
      %s25 = sphi 0, %s32
      %s26 = sphi 0, %s24
      %s27 = sphi 0, %s25
      %s28 = sphi 0, %s26
      %s29 = sphi 0, %s27
      %s43 = sphi 0, %s45
      %s46 = sphi 0, %s43
      %s47 = sphi 0, %s46
      %s63 = sphi 0, %s47
      %s73 = sphi 0, %s75
      %s76 = sphi 0, %s73
      %s77 = sphi 0, %s76
      %s93 = sphi 0, %s77
      %s103 = sphi 0, %s105
      %s106 = sphi 0, %s103
      %s107 = sphi 0, %s106
      %s123 = sphi 0, %s107
      %s127 = sphi 0, %s127
      %s129 = sphi 0, %s127
      %s130 = sphi 0, %s129
      %s144 = sphi 0, %s130
      %s150 = sphi 0, %s152
      %s153 = sphi 0, %s150
      %s154 = sphi 0, %s153
      %s170 = sphi 0, %s154
    $region4: #{tpu_custom_call.1} parent=1 // loop_header_branch
      %20 = sbr.rel (%p18) target = $region8
    $region5: #{tpu_custom_call.1} parent=1 // loop_body
      %s22 = ssub.s32 %s17, 1
      %s23 = ssub.s32 %s17, 2
      %s30 = sadd.s32 1, %s25
      %p31 = scmp.ge.s32.totalorder %s30, 4
      %s32 = scalar_select %p31, 0, %s30
      %s33 = sadd.s32 1, %s24
      %s34 = scalar_select %p31, %s33, %s24
      %p35 = scmp.ge.s32.totalorder %s34, 1
      %s36 = scalar_select %p35, 0, %s34
      %s37 = smul.u32 %s24, 4
      %s38 = sadd.s32 %s37, %s25
      %s39 = smul.u32 %s36, 4
      %s40 = sadd.s32 %s39, %s32
      %s41 = ssub.s32 %s38, %s40
      %p42 = scmp.eq.s32.totalorder %s41, 0
      %s44 = sadd.s32 %s43, 1
      %s45 = scalar_select %p42, %s43, %s44
      %p48 = pneg %p42
      %p49 = scmp.eq.s32.totalorder %s17, 3
      %p50 = por %p48, %p49
      %p51 = scmp.ne.s32.totalorder %s43, %s46
      %p52 = scmp.eq.s32.totalorder %s17, 0
      %p53 = por %p51, %p52
      %p54 = scmp.ne.s32.totalorder %s43, %s46
      %p55 = scmp.eq.s32.totalorder %s22, 3
      %p56 = por %p54, %p55
      %p57 = scmp.ne.s32.totalorder %s46, %s47
      %p58 = scmp.eq.s32.totalorder %s22, 0
      %p59 = por %p57, %p58
      %p60 = scmp.ne.s32.totalorder %s46, %s47
      %p61 = scmp.eq.s32.totalorder %s23, 3
      %p62 = por %p60, %p61
      %p64 = scmp.ne.s32.totalorder %s47, %s63
      %p65 = scmp.eq.s32.totalorder %s23, 0
      %p66 = por %p64, %p65
      %s67 = smul.u32 %s24, 4
      %s68 = sadd.s32 %s67, %s25
      %s69 = smul.u32 %s36, 4
      %s70 = sadd.s32 %s69, %s32
      %s71 = ssub.s32 %s68, %s70
      %p72 = scmp.eq.s32.totalorder %s71, 0
      %s74 = sadd.s32 %s73, 1
      %s75 = scalar_select %p72, %s73, %s74
      %p78 = pneg %p72
      %p79 = scmp.eq.s32.totalorder %s17, 3
      %p80 = por %p78, %p79
      %p81 = scmp.ne.s32.totalorder %s73, %s76
      %p82 = scmp.eq.s32.totalorder %s17, 0
      %p83 = por %p81, %p82
      %p84 = scmp.ne.s32.totalorder %s73, %s76
      %p85 = scmp.eq.s32.totalorder %s22, 3
      %p86 = por %p84, %p85
      %p87 = scmp.ne.s32.totalorder %s76, %s77
      %p88 = scmp.eq.s32.totalorder %s22, 0
      %p89 = por %p87, %p88
      %p90 = scmp.ne.s32.totalorder %s76, %s77
      %p91 = scmp.eq.s32.totalorder %s23, 3
      %p92 = por %p90, %p91
      %p94 = scmp.ne.s32.totalorder %s77, %s93
      %p95 = scmp.eq.s32.totalorder %s23, 0
      %p96 = por %p94, %p95
      %s97 = smul.u32 %s24, 4
      %s98 = sadd.s32 %s97, %s25
      %s99 = smul.u32 %s36, 4
      %s100 = sadd.s32 %s99, %s32
      %s101 = ssub.s32 %s98, %s100
      %p102 = scmp.eq.s32.totalorder %s101, 0
      %s104 = sadd.s32 %s103, 1
      %s105 = scalar_select %p102, %s103, %s104
      %p108 = pneg %p102
      %p109 = scmp.eq.s32.totalorder %s17, 3
      %p110 = por %p108, %p109
      %p111 = scmp.ne.s32.totalorder %s103, %s106
      %p112 = scmp.eq.s32.totalorder %s17, 0
      %p113 = por %p111, %p112
      %p114 = scmp.ne.s32.totalorder %s103, %s106
      %p115 = scmp.eq.s32.totalorder %s22, 3
      %p116 = por %p114, %p115
      %p117 = scmp.ne.s32.totalorder %s106, %s107
      %p118 = scmp.eq.s32.totalorder %s22, 0
      %p119 = por %p117, %p118
      %p120 = scmp.ne.s32.totalorder %s106, %s107
      %p121 = scmp.eq.s32.totalorder %s23, 3
      %p122 = por %p120, %p121
      %p124 = scmp.ne.s32.totalorder %s107, %s123
      %p125 = scmp.eq.s32.totalorder %s23, 0
      %p126 = por %p124, %p125
      %s128 = sadd.s32 %s127, 1
      %p131 = scmp.eq.s32.totalorder %s17, 3
      %p132 = scmp.ne.s32.totalorder %s127, %s129
      %p133 = scmp.eq.s32.totalorder %s17, 0
      %p134 = por %p132, %p133
      %p135 = scmp.ne.s32.totalorder %s127, %s129
      %p136 = scmp.eq.s32.totalorder %s22, 3
      %p137 = por %p135, %p136
      %p138 = scmp.ne.s32.totalorder %s129, %s130
      %p139 = scmp.eq.s32.totalorder %s22, 0
      %p140 = por %p138, %p139
      %p141 = scmp.ne.s32.totalorder %s129, %s130
      %p142 = scmp.eq.s32.totalorder %s23, 3
      %p143 = por %p141, %p142
      %p145 = scmp.ne.s32.totalorder %s130, %s144
      %p146 = scmp.eq.s32.totalorder %s23, 0
      %p147 = por %p145, %p146
      %s148 = ssub.s32 %s24, %s36
      %p149 = scmp.eq.s32.totalorder %s148, 0
      %s151 = sadd.s32 %s150, 1
      %s152 = scalar_select %p149, %s150, %s151
      %p155 = pneg %p149
      %p156 = scmp.eq.s32.totalorder %s17, 3
      %p157 = por %p155, %p156
      %p158 = scmp.ne.s32.totalorder %s150, %s153
      %p159 = scmp.eq.s32.totalorder %s17, 0
      %p160 = por %p158, %p159
      %p161 = scmp.ne.s32.totalorder %s150, %s153
      %p162 = scmp.eq.s32.totalorder %s22, 3
      %p163 = por %p161, %p162
      %p164 = scmp.ne.s32.totalorder %s153, %s154
      %p165 = scmp.eq.s32.totalorder %s22, 0
      %p166 = por %p164, %p165
      %p167 = scmp.ne.s32.totalorder %s153, %s154
      %p168 = scmp.eq.s32.totalorder %s23, 3
      %p169 = por %p167, %p168
      %p171 = scmp.ne.s32.totalorder %s154, %s170
      %p172 = scmp.eq.s32.totalorder %s23, 0
      %p173 = por %p171, %p172
      %p174 = scmp.le.s32.totalorder 1, %s17
      %p175 = scmp.lt.s32.totalorder %s17, 5
      %p176 = pnand %p174, %p175
      %p177 = pneg %p176
      // Predicated region
      $region9: #{tpu_custom_call.1} parent=5 // pred_check
        _
      $region10: #{tpu_custom_call.1} parent=5 // pred_check_branch
        %179 = sbr.rel (%p176) target = $region12
      $region11: #{tpu_custom_call.1} parent=5 // pred_region
        %s180 = ssub.s32 %s17, 1
        // Predicated region
        $region13: #{tpu_custom_call.1} parent=11 // pred_check
          %p181 = pneg %p140
        $region14: #{tpu_custom_call.1} parent=11 // pred_check_branch
          %183 = sbr.rel (%p181) target = $region16
        $region15: #{tpu_custom_call.1} parent=11 // pred_region
          _
        $region16: #{tpu_custom_call.1} parent=11 // pred_fallthru
          _
      $region12: #{tpu_custom_call.1} parent=5 // pred_fallthru
        _
      %p184 = scmp.lt.s32.totalorder %s17, 4
      // Predicated region
      $region17: #{tpu_custom_call.1} parent=5 // pred_check
        %p185 = pneg %p184
      $region18: #{tpu_custom_call.1} parent=5 // pred_check_branch
        %187 = sbr.rel (%p185) target = $region20
      $region19: #{tpu_custom_call.1} parent=5 // pred_region
        // Predicated region
        $region21: #{tpu_custom_call.1} parent=19 // pred_check
          %p188 = pneg %p53
        $region22: #{tpu_custom_call.1} parent=19 // pred_check_branch
          %190 = sbr.rel (%p188) target = $region24
        $region23: #{tpu_custom_call.1} parent=19 // pred_region
          %s191 = sand.u32 %s43, 1
          %s192 = scalar_lea.sflag [#allocation7], %s191
          %s193 = sand.u32 %s43, 1
          %s194 = smul.addr %s193, 4
          %s195 = scalar_lea.vmem [#allocation6], %s194
          %s196 = smul.u32 %s24, 4
          %s197 = sadd.s32 %s196, %s25
          %s198 = smul.u32 2, %s197
          %s200 = ssub.s32 64, 64
          %201 = vsyncadd %s192, %s200
          %s202 = smul.addr %s198, 32
          %s203 = scalar_lea.hbm %s0, %s202
          %s204 = sshll.u32 %s195, 4
          %s205 = int_to_ptr.vmem [resolvable:$true] %s204
          %210 = dma.hbm_to_vmem [thread:$0]  %s203, 64, %s205, %s192, 32, 32, 2
        $region24: #{tpu_custom_call.1} parent=19 // pred_fallthru
          _
        // Predicated region
        $region25: #{tpu_custom_call.1} parent=19 // pred_check
          %p211 = pneg %p83
        $region26: #{tpu_custom_call.1} parent=19 // pred_check_branch
          %213 = sbr.rel (%p211) target = $region28
        $region27: #{tpu_custom_call.1} parent=19 // pred_region
          %s214 = sand.u32 %s17, 1
          %s215 = scalar_lea.sflag [#allocation10], %s214
          %s216 = sand.u32 %s73, 1
          %s217 = smul.addr %s216, 4
          %s218 = scalar_lea.vmem [#allocation9], %s217
          %s219 = smul.u32 %s24, 4
          %s220 = sadd.s32 %s219, %s25
          %s221 = smul.u32 2, %s220
          %s223 = ssub.s32 64, 64
          %224 = vsyncadd %s215, %s223
          %s225 = smul.addr %s221, 32
          %s226 = scalar_lea.hbm %s1, %s225
          %s227 = sshll.u32 %s218, 4
          %s228 = int_to_ptr.vmem [resolvable:$true] %s227
          %233 = dma.hbm_to_vmem [thread:$0]  %s226, 64, %s228, %s215, 32, 32, 2
        $region28: #{tpu_custom_call.1} parent=19 // pred_fallthru
          _
        // Predicated region
        $region29: #{tpu_custom_call.1} parent=19 // pred_check
          %p234 = pneg %p113
        $region30: #{tpu_custom_call.1} parent=19 // pred_check_branch
          %236 = sbr.rel (%p234) target = $region32
        $region31: #{tpu_custom_call.1} parent=19 // pred_region
          %s237 = sand.u32 %s17, 1
          %s238 = scalar_lea.sflag [#allocation10], %s237
          %s239 = sand.u32 %s103, 1
          %s240 = smul.addr %s239, 2
          %s241 = scalar_lea.vmem [#allocation11], %s240
          %s242 = smul.u32 %s24, 4
          %s243 = sadd.s32 %s242, %s25
          %s245 = ssub.s32 32, 32
          %246 = vsyncadd %s238, %s245
          %s247 = smul.addr %s243, 32
          %s248 = scalar_lea.hbm %s2, %s247
          %s250 = sshll.u32 %s241, 4
          %s251 = int_to_ptr.vmem [resolvable:$true] %s250
          %253 = dma.hbm_to_vmem [thread:$0]  %s248, 32, %s251, %s238
        $region32: #{tpu_custom_call.1} parent=19 // pred_fallthru
          _
      $region20: #{tpu_custom_call.1} parent=5 // pred_fallthru
        _
      %p254 = scmp.le.s32.totalorder 1, %s17
      %p255 = scmp.lt.s32.totalorder %s17, 5
      %p256 = pnand %p254, %p255
      %p257 = pneg %p256
      // Predicated region
      $region33: #{tpu_custom_call.1} parent=5 // pred_check
        _
      $region34: #{tpu_custom_call.1} parent=5 // pred_check_branch
        %259 = sbr.rel (%p256) target = $region36
      $region35: #{tpu_custom_call.1} parent=5 // pred_region
        %s260 = ssub.s32 %s17, 1
        %s261 = sand.u32 %s46, 1
        %s262 = scalar_lea.sflag [#allocation7], %s261
        %s263 = sand.u32 %s46, 1
        %s264 = smul.addr %s263, 4
        %s265 = scalar_lea.vmem [#allocation6], %s264
        // Predicated region
        $region37: #{tpu_custom_call.1} parent=35 // pred_check
          %p266 = pneg %p59
        $region38: #{tpu_custom_call.1} parent=35 // pred_check_branch
          %268 = sbr.rel (%p266) target = $region40
        $region39: #{tpu_custom_call.1} parent=35 // pred_region
          %269 = dma.done %s262, 64
        $region40: #{tpu_custom_call.1} parent=35 // pred_fallthru
          _
        %s270 = sand.u32 %s22, 1
        %s271 = scalar_lea.sflag [#allocation10], %s270
        %s272 = sand.u32 %s76, 1
        %s273 = smul.addr %s272, 4
        %s274 = scalar_lea.vmem [#allocation9], %s273
        // Predicated region
        $region41: #{tpu_custom_call.1} parent=35 // pred_check
          %p275 = pneg %p89
        $region42: #{tpu_custom_call.1} parent=35 // pred_check_branch
          %277 = sbr.rel (%p275) target = $region44
        $region43: #{tpu_custom_call.1} parent=35 // pred_region
          %278 = dma.done %s271, 64
        $region44: #{tpu_custom_call.1} parent=35 // pred_fallthru
          _
        %s279 = sand.u32 %s22, 1
        %s280 = scalar_lea.sflag [#allocation10], %s279
        %s281 = sand.u32 %s106, 1
        %s282 = smul.addr %s281, 2
        %s283 = scalar_lea.vmem [#allocation11], %s282
        // Predicated region
        $region45: #{tpu_custom_call.1} parent=35 // pred_check
          %p284 = pneg %p119
        $region46: #{tpu_custom_call.1} parent=35 // pred_check_branch
          %286 = sbr.rel (%p284) target = $region48
        $region47: #{tpu_custom_call.1} parent=35 // pred_region
          %287 = dma.done %s280, 32
        $region48: #{tpu_custom_call.1} parent=35 // pred_fallthru
          _
        %s288 = sand.u32 %s46, 1
        %s289 = scalar_lea.sflag [#allocation7], %s288
        %s290 = sand.u32 %s46, 1
        %s291 = smul.addr %s290, 4
        %s292 = scalar_lea.vmem [#allocation6], %s291
        %p293 = pneg %p59
        %p294 = pneg %p56
        %s295 = sand.u32 %s22, 1
        %s296 = scalar_lea.sflag [#allocation10], %s295
        %s297 = sand.u32 %s76, 1
        %s298 = smul.addr %s297, 4
        %s299 = scalar_lea.vmem [#allocation9], %s298
        %p300 = pneg %p89
        %p301 = pneg %p86
        %s302 = sand.u32 %s22, 1
        %s303 = scalar_lea.sflag [#allocation10], %s302
        %s304 = sand.u32 %s106, 1
        %s305 = smul.addr %s304, 2
        %s306 = scalar_lea.vmem [#allocation11], %s305
        %p307 = pneg %p119
        %p308 = pneg %p116
        %p309 = pneg %p140
        %p310 = pneg %p137
        %p311 = pneg %p166
        %p312 = pneg %p163
        %s313 = smul.u32 %s26, 4
        %s314 = sadd.s32 %s313, %s27
        %s315 = smul.u32 2, %s314
        %s316 = smul.u32 %s26, 4
        %s317 = sadd.s32 %s316, %s27
        %s318 = smul.u32 2, %s317
        %s319 = smul.u32 %s26, 4
        %s320 = sadd.s32 %s319, %s27
        %p321 = scmp.eq.s32.totalorder %s27, 0
        // Predicated region
        $region49: #{tpu_custom_call.1} parent=35 // pred_check
          %p322 = pneg %p321
        $region50: #{tpu_custom_call.1} parent=35 // pred_check_branch
          %324 = sbr.rel (%p322) target = $region52
        $region51: #{tpu_custom_call.1} parent=35 // pred_region
          %vm325 = vcmask 0
          %326 = vst.msk [vmem:[#allocation2] sm:$0x1] %vm325, 0.0
          %327 = vst [vmem:[#allocation3] sm:$0x3] 0.0
          %328 = vst [vmem:[#allocation4] sm:$0x3] 0.0
          %329 = vst [vmem:[#allocation5] sm:$0x3] 0.0
        $region52: #{tpu_custom_call.1} parent=35 // pred_fallthru
          _
        %v330 = vld [vmem:[%s283] sm:$0x3]
        %v331 = vld [vmem:[%s274] sm:$0x3]
        %v332 = vld [vmem:[%s274 + $0x2] sm:$0x3]
        %vm333 = vcmask 1041408
        %v334 = vsel %vm333, %v330, 0.0
        %335 = vadd.xlane.f32.xlu0 %v334
        %v336 = vpop.xlane.xlu0 %335
        %v337 = vrcp.pop 128.0
        %v338 = vmul.f32 %v336, %v337
        %v339 = vld [vmem:[#allocation2] sm:$0x1]
        %v340 = vmul.f32 %v338, %v338
        %v341 = vsel %vm333, %v340, 0.0
        %v342 = vrot.slane %v341, 4
        %v343 = vadd.f32 %v341, %v342
        %v344 = vrot.slane %v343, 2
        %v345 = vadd.f32 %v343, %v344
        %v346 = vrot.slane %v345, 1
        %v347 = vadd.f32 %v345, %v346
        %v348 = vadd.f32 %v339, %v347
        %vm349 = vcmask 0
        %350 = vst.msk [vmem:[#allocation2] sm:$0x1] %vm349, %v348
        %v353 = vunpack.c.l.s4 1966171168
        %v354 = vunpack.c.0.s8 %v353
        %v355 = vlaneseq
        %v356 = vshrl.u32 %v355, 7
        %v357 = vsub.s32 %v354, %v356
        %v358 = vrot.slane %v330, %v357
        %v359 = vcombine.high %v358, %v358
        %v361 = vunpack.c.l.s4 1966171168
        %v362 = vunpack.c.0.s8 %v361
        %v363 = vlaneseq
        %v364 = vshrl.u32 %v363, 7
        %v365 = vsub.s32 %v362, %v364
        %v366 = vrot.slane %v358, %v365
        %v368 = vunpack.c.l.s4 1966171168
        %v369 = vunpack.c.0.s8 %v368
        %v370 = vlaneseq
        %v371 = vshrl.u32 %v370, 7
        %v372 = vsub.s32 %v369, %v371
        %v373 = vrot.slane %v359, %v372
        %v374 = vlaneseq
        %v375 = vshrl.u32 %v374, 7
        %v376 = vsub.s32 0, %v375
        %v377 = vrot.slane %v366, %v376
        %v378 = vlaneseq
        %v379 = vshrl.u32 %v378, 7
        %v380 = vsub.s32 0, %v379
        %v381 = vrot.slane %v373, %v380
        %v384 = vadd.f32 %v331, %v377
        %v385 = vadd.f32 %v332, %v381
        %v386 = vld [vmem:[%s265] sm:$0x3]
        %v387 = vld [vmem:[%s265 + $0x2] sm:$0x3]
        %v388 = vsub.f32 %v384, %v386
        %v389 = vsub.f32 %v385, %v387
        %v390 = vld [vmem:[#allocation3] sm:$0x3]
        %v391 = vmul.f32 %v388, %v388
        %v392 = vmul.f32 %v389, %v389
        %v393 = vsel %vm333, %v391, 0.0
        %v394 = vsel %vm333, %v392, 0.0
        %v395 = vadd.f32 %v393, %v394
        %v396 = vadd.f32 %v390, %v395
        %397 = vst [vmem:[#allocation3] sm:$0x3] %v396
        %398 = vrot.lane.b32.xlu0 %v331, 127
        %v399 = vpop.permute.xlu0 %398
        %400 = vrot.lane.b32.xlu0 %v332, 127
        %v401 = vpop.permute.xlu0 %400
        %v402 = vld [vmem:[#allocation5] sm:$0x3]
        %v403 = vsub.f32 %v399, %v331
        %v404 = vsub.f32 %v401, %v332
        %v405 = vand.u32 2147483647, %v403
        %v406 = vand.u32 2147483647, %v404
        %v407 = vld [vmem:[%s3] sm:$0x3]
        %v408 = vmul.f32 %v405, %v407
        %v409 = vmul.f32 %v406, %v407
        %v410 = vsel %vm333, %v408, 0.0
        %v411 = vsel %vm333, %v409, 0.0
        %v412 = vadd.f32 %v410, %v411
        %v413 = vadd.f32 %v402, %v412
        %414 = vst [vmem:[#allocation5] sm:$0x3] %v413
        %p415 = scmp.eq.s32.totalorder %s27, 3
        // Predicated region
        $region53: #{tpu_custom_call.1} parent=35 // pred_check
          %p416 = pneg %p415
        $region54: #{tpu_custom_call.1} parent=35 // pred_check_branch
          %418 = sbr.rel (%p416) target = $region56
        $region55: #{tpu_custom_call.1} parent=35 // pred_region
          %v419 = vld [vmem:[#allocation2] sm:$0x1]
          %v420 = vmul.f32 %v419, 0.00125
          %v421 = vld [vmem:[#allocation3] sm:$0x3]
          %v422 = vsel %vm333, %v421, 0.0
          %423 = vadd.xlane.f32.xlu0 %v422
          %v424 = vpop.xlane.xlu0 %423
          %v425 = vsel %vm333, %v424, 0.0
          %v426 = vrot.slane %v425, 4
          %v427 = vadd.f32 %v425, %v426
          %v428 = vrot.slane %v427, 2
          %v429 = vadd.f32 %v427, %v428
          %v430 = vrot.slane %v429, 1
          %v431 = vadd.f32 %v429, %v430
          %v432 = vmul.f32 %v431, 0.00048828125
          %v433 = vld [vmem:[#allocation5] sm:$0x3]
          %v434 = vsel %vm333, %v433, 0.0
          %435 = vadd.xlane.f32.xlu0 %v434
          %v436 = vpop.xlane.xlu0 %435
          %v437 = vsel %vm333, %v436, 0.0
          %v438 = vrot.slane %v437, 4
          %v439 = vadd.f32 %v437, %v438
          %v440 = vrot.slane %v439, 2
          %v441 = vadd.f32 %v439, %v440
          %v442 = vrot.slane %v441, 1
          %v443 = vadd.f32 %v441, %v442
          %v444 = vmul.f32 %v443, 6.6964285e-06
          %445 = vst.msk [vmem:[#allocation12] sm:$0x1] %vm349, %v420
          %vm446 = vcmask 8200
          %447 = vst.msk [vmem:[#allocation12] sm:$0x1] %vm446, %v432
          %vm448 = vcmask 16400
          %449 = vst.msk [vmem:[#allocation12] sm:$0x1] %vm448, 0.0
          %vm450 = vcmask 24600
          %451 = vst.msk [vmem:[#allocation12] sm:$0x1] %vm450, %v444
        $region56: #{tpu_custom_call.1} parent=35 // pred_fallthru
          _
        // Predicated region
        $region57: #{tpu_custom_call.1} parent=35 // pred_check
          %p452 = pneg %p163
        $region58: #{tpu_custom_call.1} parent=35 // pred_check_branch
          %454 = sbr.rel (%p452) target = $region60
        $region59: #{tpu_custom_call.1} parent=35 // pred_region
          %s456 = ssub.s32 16, 16
          %457 = vsyncadd [#allocation8], %s456
          %s458 = smul.addr %s26, 16
          %s459 = scalar_lea.hbm %s4, %s458
          %s461 = sshll.u32 [#allocation12], 4
          %s462 = int_to_ptr.vmem [resolvable:$true] %s461
          %464 = dma.vmem_to_hbm [thread:$0]  %s462, 16, %s459, [#allocation8]
        $region60: #{tpu_custom_call.1} parent=35 // pred_fallthru
          _
        // Predicated region
        $region61: #{tpu_custom_call.1} parent=35 // pred_check
          %p465 = pneg %p163
        $region62: #{tpu_custom_call.1} parent=35 // pred_check_branch
          %467 = sbr.rel (%p465) target = $region64
        $region63: #{tpu_custom_call.1} parent=35 // pred_region
          %468 = dma.done [#allocation8], 16
        $region64: #{tpu_custom_call.1} parent=35 // pred_fallthru
          _
      $region36: #{tpu_custom_call.1} parent=5 // pred_fallthru
        _
      %p469 = scmp.le.s32.totalorder 2, %s17
      // Predicated region
      $region65: #{tpu_custom_call.1} parent=5 // pred_check
        %p470 = pneg %p469
      $region66: #{tpu_custom_call.1} parent=5 // pred_check_branch
        %472 = sbr.rel (%p470) target = $region68
      $region67: #{tpu_custom_call.1} parent=5 // pred_region
        %s473 = ssub.s32 %s17, 2
      $region68: #{tpu_custom_call.1} parent=5 // pred_fallthru
        _
    $region6: #{tpu_custom_call.1} parent=1 // loop_footer
      %s21 = sadd.s32 1, %s17
    $region7: #{tpu_custom_call.1} parent=1 // loop_footer_branch
      %16 = sbr.rel target = $region3
    $region8: #{tpu_custom_call.1} parent=1 // loop_exit
      _
    %474 = vsyncpa [#allocation7], 1
    %s475 = scalar_lea.sflag [#allocation7], 1
    %476 = vsyncpa %s475, 1
    %477 = vsyncpa [#allocation10], 1
    %s478 = scalar_lea.sflag [#allocation10], 1
    %479 = vsyncpa %s478, 1
    %480 = vsyncpa [#allocation8], 1
    %s481 = scalar_lea.sflag [#allocation8], 1
    %482 = vsyncpa %s481, 1

</llo_original>
